<compile_context>
chip_gen: v6e
topology: v6e:2x2x1
jax: 0.10.0
libtpu: 0.0.40
codegen_flags: <defaults>
</compile_context>

<pallas_src>
import jax
import jax.numpy as jnp
from jax.experimental import pallas as pl
from jax.experimental.pallas import tpu as pltpu


def _round_up(n, m):
    return ((n + m - 1) // m) * m


def _poi2d_kernel(a_ref, x_ref, o_ref):
    # a_ref: (1,) f32 in SMEM  -- 0.5 * a, folded at trace time
    # x_ref: (2, Rblk, C) f32 VMEM -- [0] = x[:,0] slab, [1] = x[:,1] slab
    # o_ref: (Rblk, C) f32 VMEM
    s = a_ref[0]
    x0 = x_ref[0]                               # (Rblk, C)
    x1 = x_ref[1]                               # (Rblk, C)
    o_ref[...] = s * (x0 * (x0 - 1.0)) * (x1 * (x1 - 1.0))


def poi2d_with_a_exact(x, a, *, lanes=1024, block_rows=256):
    """x: (N, >=2) float, a: scalar -> (N, 1) float32."""
    x = jnp.asarray(x, jnp.float32)
    N = x.shape[0]

    # ---- slab geometry -------------------------------------------------
    # Lane width C: multiple of 128; use the full `lanes` width for large N.
    C = lanes if N >= 8 * lanes else 128
    R_total = -(-N // C)                                  # rows needed
    Rblk = min(block_rows, _round_up(R_total, 8))         # rows / block (mult. of 8)
    R_pad = _round_up(max(R_total, Rblk), Rblk)           # total rows (mult. of Rblk)
    Np = R_pad * C

    # ---- single layout pass: (N,2) -> (2, R_pad, C) dense slabs --------
    xt = x[:, :2].T                                       # (2, N)
    if Np != N:
        xt = jnp.pad(xt, ((0, 0), (0, Np - N)))           # padded tail -> 0, discarded
    x_slab = xt.reshape(2, R_pad, C)

    # 0.5 folded into the coefficient at trace time.
    a_arr = (0.5 * jnp.asarray(a, jnp.float32)).reshape(1)

    grid = (R_pad // Rblk,)
    out = pl.pallas_call(
        _poi2d_kernel,
        out_shape=jax.ShapeDtypeStruct((R_pad, C), jnp.float32),
        grid_spec=pl.GridSpec(
            grid=grid,
            in_specs=[
                pl.BlockSpec(memory_space=pltpu.MemorySpace.SMEM),   # scalar 0.5*a
                pl.BlockSpec((2, Rblk, C), lambda r: (0, r, 0)),     # x0/x1 slabs
            ],
            out_specs=pl.BlockSpec((Rblk, C), lambda r: (r, 0)),     # out slab
        ),
        compiler_params=pltpu.CompilerParams(
            dimension_semantics=("parallel",),
        ),
        cost_estimate=pl.CostEstimate(
            flops=6 * Np, transcendentals=0, bytes_accessed=12 * Np),
    )(a_arr, x_slab)

    # Contiguous view back to (N, 1); only the tail slice may copy.
    return out.reshape(Np)[:N].reshape(N, 1)


def poi2d_with_a_exact_ref(x, a):
    # pure-JAX reference (mirrors the PyTorch forward exactly)
    x = jnp.asarray(x, jnp.float32)
    x0 = x[:, 0]
    x1 = x[:, 1]
    return (0.5 * a * (x0 * (x0 - 1.0)) * (x1 * (x1 - 1.0)))[:, None]


if __name__ == "__main__":
    key = jax.random.PRNGKey(0)
    N = 16                                  # batch of 2-D points
    x = jax.random.uniform(key, (N, 2), dtype=jnp.float32)
    a = 2.5                                 # scalar coefficient `a`

    out = poi2d_with_a_exact(x, a)
    out = jax.block_until_ready(out)

    ref = poi2d_with_a_exact_ref(x, a)
    assert out.shape == (N, 1), out.shape
    assert jnp.allclose(out, ref, atol=1e-6, rtol=1e-6), (
        float(jnp.max(jnp.abs(out - ref)))
    )
    print("KERNEL_OK")
</pallas_src>

<mosaic_0001>
module attributes {stable_mosaic.version = 11 : i64} {
  func.func @_poi2d_kernel(%arg0: i32, %arg1: memref<1xf32, #tpu.memory_space<smem>>, %arg2: memref<2x8x128xf32, #tpu.memory_space<vmem>>, %arg3: memref<8x128xf32, #tpu.memory_space<vmem>>) attributes {dimension_semantics = [#tpu.dimension_semantics<parallel>], iteration_bounds = array<i64: 1>, scalar_prefetch = 0 : i64, scratch_operands = 0 : i64, tpu.core_type = #tpu.core_type<tc>, window_params = [{transform_indices = @transform_0, window_bounds = array<i64: 1>}, {transform_indices = @transform_1, window_bounds = array<i64: 2, 8, 128>}, {transform_indices = @transform_2, window_bounds = array<i64: 8, 128>}]} {
    %c0 = arith.constant 0 : index
    %0 = memref.load %arg1[%c0] : memref<1xf32, #tpu.memory_space<smem>>
    %c0_0 = arith.constant 0 : index
    %c0_1 = arith.constant 0 : index
    %c0_2 = arith.constant 0 : index
    %1 = vector.load %arg2[%c0_0, %c0_1, %c0_2] : memref<2x8x128xf32, #tpu.memory_space<vmem>>, vector<1x8x128xf32>
    %2 = vector.shape_cast %1 : vector<1x8x128xf32> to vector<8x128xf32>
    %c1 = arith.constant 1 : index
    %c0_3 = arith.constant 0 : index
    %c0_4 = arith.constant 0 : index
    %3 = vector.load %arg2[%c1, %c0_3, %c0_4] : memref<2x8x128xf32, #tpu.memory_space<vmem>>, vector<1x8x128xf32>
    %4 = vector.shape_cast %3 : vector<1x8x128xf32> to vector<8x128xf32>
    %cst = arith.constant 1.000000e+00 : f32
    %5 = vector.broadcast %cst : f32 to vector<8x128xf32>
    %6 = arith.subf %2, %5 : vector<8x128xf32>
    %7 = arith.mulf %2, %6 : vector<8x128xf32>
    %8 = vector.broadcast %0 : f32 to vector<8x128xf32>
    %9 = arith.mulf %8, %7 : vector<8x128xf32>
    %cst_5 = arith.constant 1.000000e+00 : f32
    %10 = vector.broadcast %cst_5 : f32 to vector<8x128xf32>
    %11 = arith.subf %4, %10 : vector<8x128xf32>
    %12 = arith.mulf %4, %11 : vector<8x128xf32>
    %13 = arith.mulf %9, %12 : vector<8x128xf32>
    %c0_6 = arith.constant 0 : index
    %c0_7 = arith.constant 0 : index
    %14 = vector.load %arg3[%c0_6, %c0_7] : memref<8x128xf32, #tpu.memory_space<vmem>>, vector<8x128xf32>
    tpu.vector_store %arg3[%c0_6, %c0_7], %13 {strides = array<i32>} : memref<8x128xf32, #tpu.memory_space<vmem>>, vector<8x128xf32>,
    return
  }
  func.func @transform_0(%arg0: i32) -> i32 {
    %c0_i32 = arith.constant 0 : i32
    %c0_i32_0 = arith.constant 0 : i32
    return %c0_i32 : i32
  }
  func.func @transform_1(%arg0: i32) -> (i32, i32, i32) {
    %c0_i32 = arith.constant 0 : i32
    %c0_i32_0 = arith.constant 0 : i32
    %c0_i32_1 = arith.constant 0 : i32
    return %c0_i32, %arg0, %c0_i32_0 : i32, i32, i32
  }
  func.func @transform_2(%arg0: i32) -> (i32, i32) {
    %c0_i32 = arith.constant 0 : i32
    %c0_i32_0 = arith.constant 0 : i32
    return %arg0, %c0_i32 : i32, i32
  }
}

</mosaic_0001>

<llo_original>
// kernel: tpu_custom_call.1
$region0: #{tpu_custom_call.1}
  #allocation0 [shape = 'u32[]', space=smem, size = 0x4, offset = 0x4, fixed_abs, tag = 'smem constant byte address 0x4 - core index']
  #allocation1 [shape = 'u32[144,128]{1,0:T(1,128)}', space=vmem, size = 0x12000, scoped, tag = 'internal scratch']
  #allocation2 [shape = 'f32[1]{0:T(128)S(6)}', space=smem, size = 0x200, scoped, tag = 'scoped memory for tpu_custom_call.1']
  %s0 = inlined_call_operand.<no memory space> [shape: f32[1], index: 0, kind: input, shape index: {}]
  %s1 = inlined_call_operand.hbm [shape: f32[2,8,128], index: 1, kind: input, shape index: {}]
  %s2 = inlined_call_operand.hbm [shape: f32[8,128], index: 2, kind: output, shape index: {}]
  %s3 = sld [smem:[#allocation0]]
  $region22: #{tpu_custom_call.1} parent=0
    _
  %s5 = ssub.s32 1, %s3
  %s6 = scalar_select 0, %s5, %s3
  %7 = sst [smem:[#allocation2]] %s0
  $region1: #{tpu_custom_call.1} parent=0
    #allocation3 [shape = 'u8[8192]{0}', space=vmem, size = 0x2000, scoped, tag = 'input window, operand 1, single buffered']
    #allocation4 [shape = 's32[1]{0}', space=sflag, size = 0x4, scoped, tag = 'scoped memory for tpu_custom_call.1']
    #allocation5 [shape = 's32[1]{0}', space=sflag, size = 0x4, scoped, tag = 'scoped memory for tpu_custom_call.1']
    #allocation6 [shape = 'u8[4096]{0}', space=vmem, size = 0x1000, scoped, tag = 'output window, operand 0, single buffered']
    %8 = vsyncpa [#allocation4], 0
    %9 = vsyncpa [#allocation5], 0
    // Predicated region
    $region2: #{tpu_custom_call.1} parent=1 // pred_check
      _
    $region3: #{tpu_custom_call.1} parent=1 // pred_check_branch
      %11 = sbr.rel (0) target = $region5
    $region4: #{tpu_custom_call.1} parent=1 // pred_region
      _
    $region5: #{tpu_custom_call.1} parent=1 // pred_fallthru
      _
    // Predicated region
    $region6: #{tpu_custom_call.1} parent=1 // pred_check
      _
    $region7: #{tpu_custom_call.1} parent=1 // pred_check_branch
      %13 = sbr.rel (0) target = $region9
    $region8: #{tpu_custom_call.1} parent=1 // pred_region
      %s15 = ssub.s32 256, 256
      %16 = vsyncadd [#allocation4], %s15
      %s17 = sshll.u32 [#allocation3], 4
      %s18 = int_to_ptr.vmem [resolvable:$true] %s17
      %23 = dma.hbm_to_vmem [thread:$0]  %s1, 256, %s18, [#allocation4], 128, 128, 8
    $region9: #{tpu_custom_call.1} parent=1 // pred_fallthru
      _
    // Predicated region
    $region10: #{tpu_custom_call.1} parent=1 // pred_check
      _
    $region11: #{tpu_custom_call.1} parent=1 // pred_check_branch
      %25 = sbr.rel (0) target = $region13
    $region12: #{tpu_custom_call.1} parent=1 // pred_region
      %26 = dma.done [#allocation4], 256
    $region13: #{tpu_custom_call.1} parent=1 // pred_fallthru
      _
    %s27 = sld [smem:[#allocation2]]
    %v28 = vld [vmem:[#allocation3] sm:$0xff]
    %s29 = scalar_lea.vmem [#allocation3], 8
    %v30 = vld [vmem:[%s29] sm:$0xff]
    %v31 = vsub.f32 %v28, 1.0
    %v32 = vmul.f32 %v28, %v31
    %v33 = vstv %s27
    %v34 = vmul.f32 %v33, %v32
    %v35 = vsub.f32 %v30, 1.0
    %v36 = vmul.f32 %v30, %v35
    %v37 = vmul.f32 %v34, %v36
    %38 = vst [vmem:[#allocation6] sm:$0xff] %v37
    // Predicated region
    $region14: #{tpu_custom_call.1} parent=1 // pred_check
      _
    $region15: #{tpu_custom_call.1} parent=1 // pred_check_branch
      %40 = sbr.rel (0) target = $region17
    $region16: #{tpu_custom_call.1} parent=1 // pred_region
      %s42 = ssub.s32 128, 128
      %43 = vsyncadd [#allocation5], %s42
      %s45 = sshll.u32 [#allocation6], 4
      %s46 = int_to_ptr.vmem [resolvable:$true] %s45
      %48 = dma.vmem_to_hbm [thread:$0]  %s46, 128, %s2, [#allocation5]
    $region17: #{tpu_custom_call.1} parent=1 // pred_fallthru
      _
    // Predicated region
    $region18: #{tpu_custom_call.1} parent=1 // pred_check
      _
    $region19: #{tpu_custom_call.1} parent=1 // pred_check_branch
      %50 = sbr.rel (0) target = $region21
    $region20: #{tpu_custom_call.1} parent=1 // pred_region
      %51 = dma.done [#allocation5], 128
    $region21: #{tpu_custom_call.1} parent=1 // pred_fallthru
      _
    %52 = vsyncpa [#allocation4], 1
    %53 = vsyncpa [#allocation5], 1

</llo_original>
